<compile_context>
chip_gen: v7x
topology: tpu7x:2x2x1
jax: 0.10.0
libtpu: 0.0.40
codegen_flags: <defaults>
</compile_context>

<pallas_src>
import functools
import math

import jax
import jax.numpy as jnp
from jax import lax
from jax.experimental import pallas as pl
from jax.experimental.pallas import tpu as pltpu


def _round_up(n, m):
    return ((n + m - 1) // m) * m


# ---------------------------------------------------------------------------
# Kernel 1: K-tiled linear projection; bias (+ optional WanRMSNorm) fused into
# the last-contraction-step finalize.
# ---------------------------------------------------------------------------
def _proj_kernel(x_ref, w_ref, b_ref, g_ref, o_ref, acc_ref, *, eps, do_norm):
    # x_ref: (tl, tk) bf16   w_ref: (tk, O) bf16   b_ref/g_ref: (1, O) f32
    # o_ref: (tl, O)         acc_ref: (tl, O) f32
    kk = pl.program_id(2)

    @pl.when(kk == 0)
    def _():
        acc_ref[...] = jnp.zeros_like(acc_ref)

    acc_ref[...] += jnp.dot(x_ref[...], w_ref[...],
                            preferred_element_type=jnp.float32)

    @pl.when(kk == pl.num_programs(2) - 1)
    def _():
        y = acc_ref[...] + b_ref[0].astype(jnp.float32)
        if do_norm:
            # WanRMSNorm in f32: y * rsqrt(mean(y^2) + eps) * gamma (fused, no temps).
            ms = jnp.mean(y * y, axis=-1, keepdims=True)
            y = y * lax.rsqrt(ms + eps) * g_ref[0].astype(jnp.float32)
        o_ref[...] = y.astype(o_ref.dtype)


def _proj(x, w_t, b, gamma, *, do_norm, eps=1e-6, tl=512, tk=512,
          out_dtype=None, vmem_limit=None):
    """x: [B, L, C]; w_t: [C, O] (pre-transposed nn.Linear weight, bf16);
    b: [O] f32; gamma: [O] f32 or None."""
    B, L, C = x.shape
    O = w_t.shape[1]
    out_dtype = out_dtype or x.dtype
    tl = min(tl, L)
    tk = min(tk, C)
    # Query length is padded to a tl multiple by the caller; C is the model dim.
    assert L % tl == 0 and C % tk == 0, (L, tl, C, tk)  # TODO(synk): ragged C tiling
    if gamma is None:
        gamma = jnp.ones((O,), dtype=jnp.float32)
    kernel = functools.partial(_proj_kernel, eps=eps, do_norm=do_norm)
    isz = x.dtype.itemsize
    return pl.pallas_call(
        kernel,
        out_shape=jax.ShapeDtypeStruct((B, L, O), out_dtype),
        grid_spec=pltpu.PrefetchScalarGridSpec(
            num_scalar_prefetch=0,
            grid=(B, L // tl, C // tk),
            in_specs=[
                pl.BlockSpec((None, tl, tk), lambda b_, i, k_: (b_, i, k_)),  # x tile
                pl.BlockSpec((tk, O), lambda b_, i, k_: (k_, 0)),             # weight slab
                pl.BlockSpec((1, O), lambda b_, i, k_: (0, 0)),               # bias
                pl.BlockSpec((1, O), lambda b_, i, k_: (0, 0)),               # gamma
            ],
            out_specs=pl.BlockSpec((None, tl, O), lambda b_, i, k_: (b_, i, 0)),
            scratch_shapes=[pltpu.VMEM((tl, O), jnp.float32)],
        ),
        compiler_params=pltpu.CompilerParams(
            dimension_semantics=("parallel", "parallel", "arbitrary"),
            vmem_limit_bytes=vmem_limit),
        cost_estimate=pl.CostEstimate(
            flops=2 * B * L * C * O,
            transcendentals=0,
            bytes_accessed=isz * (B * L * C + B * (L // tl) * C * O + B * L * O)),
    )(x, w_t, b[None, :], gamma[None, :])


# ---------------------------------------------------------------------------
# Kernel 2: fused K/V projection for a (small) context: one matmul against the
# concatenated [C, 2C] weight; K half gets the RMSNorm, V half does not.
# ---------------------------------------------------------------------------
def _kv_proj_kernel(x_ref, w_ref, b_ref, g_ref, k_ref, v_ref, acc_ref, *, eps):
    kk = pl.program_id(1)

    @pl.when(kk == 0)
    def _():
        acc_ref[...] = jnp.zeros_like(acc_ref)

    acc_ref[...] += jnp.dot(x_ref[...], w_ref[...],
                            preferred_element_type=jnp.float32)

    @pl.when(kk == pl.num_programs(1) - 1)
    def _():
        co = k_ref.shape[-1]
        y = acc_ref[...] + b_ref[0].astype(jnp.float32)
        yk = y[:, :co]
        ms = jnp.mean(yk * yk, axis=-1, keepdims=True)
        k_ref[...] = (yk * lax.rsqrt(ms + eps)
                      * g_ref[0].astype(jnp.float32)).astype(k_ref.dtype)
        v_ref[...] = y[:, co:].astype(v_ref.dtype)


def _kv_proj(x, wkv_t, bkv, gamma_k, *, eps=1e-6, tk=512, out_dtype=None,
             vmem_limit=None):
    """x: [B, Lc, C]; wkv_t: [C, 2C] (concat of Wk^T|Wv^T, bf16); bkv: [2C]; gamma_k: [C]."""
    B, L, C = x.shape
    O2 = wkv_t.shape[1]
    Co = O2 // 2
    out_dtype = out_dtype or x.dtype
    tk = min(tk, C)
    assert C % tk == 0, (C, tk)
    # TODO(synk): at production scale (ctx ~512-800 tokens, C=5120) the (Lc, 2C) f32
    # accumulator is ~20-32 MiB; tile the context length too if it exceeds VMEM budget.
    kernel = functools.partial(_kv_proj_kernel, eps=eps)
    isz = x.dtype.itemsize
    return pl.pallas_call(
        kernel,
        out_shape=(jax.ShapeDtypeStruct((B, L, Co), out_dtype),
                   jax.ShapeDtypeStruct((B, L, Co), out_dtype)),
        grid_spec=pltpu.PrefetchScalarGridSpec(
            num_scalar_prefetch=0,
            grid=(B, C // tk),
            in_specs=[
                pl.BlockSpec((None, L, tk), lambda b_, k_: (b_, 0, k_)),   # context tile
                pl.BlockSpec((tk, O2), lambda b_, k_: (k_, 0)),            # [C,2C] weight slab
                pl.BlockSpec((1, O2), lambda b_, k_: (0, 0)),              # concat bias
                pl.BlockSpec((1, Co), lambda b_, k_: (0, 0)),              # K gamma
            ],
            out_specs=(pl.BlockSpec((None, L, Co), lambda b_, k_: (b_, 0, 0)),
                       pl.BlockSpec((None, L, Co), lambda b_, k_: (b_, 0, 0))),
            scratch_shapes=[pltpu.VMEM((L, O2), jnp.float32)],
        ),
        compiler_params=pltpu.CompilerParams(
            dimension_semantics=("parallel", "arbitrary"),
            vmem_limit_bytes=vmem_limit),
        cost_estimate=pl.CostEstimate(
            flops=2 * B * L * C * O2,
            transcendentals=0,
            bytes_accessed=isz * (B * L * C + B * C * O2 + 2 * B * L * Co)),
    )(x, wkv_t, bkv[None, :], gamma_k[None, :])


# ---------------------------------------------------------------------------
# Kernel 3: fused dual cross-attention (text context masked by context_lens +
# 257-token image context), operating directly on head slices of flat [B,L,C].
# ---------------------------------------------------------------------------
def _dual_attn_kernel(klen_ref, q_ref, kt_ref, vt_ref, ki_ref, vi_ref, o_ref):
    # klen_ref: SMEM (B,) int32 | q_ref: (tq, D) bf16 | kt/vt: (Lk, D) | ki/vi: (Li, D)
    b = pl.program_id(0)
    q = q_ref[...]                       # bf16 (scale already folded into gamma_q)
    kt = kt_ref[...]
    vt = vt_ref[...]
    ki = ki_ref[...]
    vi = vi_ref[...]

    # --- text-context attention: key index >= context_lens[b] masked out (f32 scores) ---
    s_t = lax.dot_general(q, kt, (((1,), (1,)), ((), ())),
                          preferred_element_type=jnp.float32)          # (tq, Lk) f32
    key_idx = lax.broadcasted_iota(jnp.int32, s_t.shape, 1)
    s_t = jnp.where(key_idx < klen_ref[b], s_t, -1e30)
    p_t = jnp.exp(s_t - jnp.max(s_t, axis=-1, keepdims=True))
    inv_t = pl.reciprocal(jnp.sum(p_t, axis=-1, keepdims=True), approx=True)
    acc = jnp.dot(p_t.astype(vt.dtype), vt,
                  preferred_element_type=jnp.float32) * inv_t

    # --- image-context attention (first 257 context tokens), unmasked ---
    s_i = lax.dot_general(q, ki, (((1,), (1,)), ((), ())),
                          preferred_element_type=jnp.float32)          # (tq, Li) f32
    p_i = jnp.exp(s_i - jnp.max(s_i, axis=-1, keepdims=True))
    inv_i = pl.reciprocal(jnp.sum(p_i, axis=-1, keepdims=True), approx=True)
    acc = acc + jnp.dot(p_i.astype(vi.dtype), vi,
                        preferred_element_type=jnp.float32) * inv_i

    o_ref[...] = acc.astype(o_ref.dtype)


def _dual_cross_attention(q, k, v, k_img, v_img, context_lens, *, num_heads,
                          tq=512, vmem_limit=None):
    """q: [B, Lq, C]; k/v: [B, Lk, C]; k_img/v_img: [B, Li, C]; context_lens: [B] int32.
    Heads are sliced via BlockSpec (last-dim block = D at offset h*D) — no transposes."""
    B, Lq, C = q.shape
    D = C // num_heads
    assert D % 128 == 0, "head-sliced BlockSpecs need head_dim % 128 == 0 (Wan uses 128)"
    Lk = k.shape[1]
    Li = k_img.shape[1]
    tq = min(tq, Lq)
    assert Lq % tq == 0, (Lq, tq)
    isz = q.dtype.itemsize
    return pl.pallas_call(
        _dual_attn_kernel,
        out_shape=jax.ShapeDtypeStruct((B, Lq, C), q.dtype),
        grid_spec=pltpu.PrefetchScalarGridSpec(
            num_scalar_prefetch=1,                                  # context_lens -> SMEM
            grid=(B, num_heads, Lq // tq),
            in_specs=[
                pl.BlockSpec((None, tq, D), lambda b_, h, i, kl: (b_, i, h)),
                pl.BlockSpec((None, Lk, D), lambda b_, h, i, kl: (b_, 0, h)),
                pl.BlockSpec((None, Lk, D), lambda b_, h, i, kl: (b_, 0, h)),
                pl.BlockSpec((None, Li, D), lambda b_, h, i, kl: (b_, 0, h)),
                pl.BlockSpec((None, Li, D), lambda b_, h, i, kl: (b_, 0, h)),
            ],
            out_specs=pl.BlockSpec((None, tq, D), lambda b_, h, i, kl: (b_, i, h)),
        ),
        compiler_params=pltpu.CompilerParams(
            dimension_semantics=("parallel", "parallel", "parallel"),
            vmem_limit_bytes=vmem_limit),
        cost_estimate=pl.CostEstimate(
            flops=4 * B * Lq * C * (Lk + Li),
            transcendentals=B * num_heads * Lq * (Lk + Li),
            bytes_accessed=isz * B * (2 * Lq * C + 2 * (Lk + Li) * C)),
    )(context_lens, q, k, v, k_img, v_img)


# ---------------------------------------------------------------------------
# Full WanI2VCrossAttention forward.
# ---------------------------------------------------------------------------
def wan_i2v_cross_attention(x, context, context_lens, params, *, num_heads, eps=1e-6,
                            seq_tile=512, tk=512, compute_dtype=jnp.bfloat16,
                            vmem_limit_bytes=48 * 1024 * 1024):
    """x: [B, Lq, C]; context: [B, 257 + Ltxt, C]; context_lens: [B] int32 (valid text lens)."""
    B, Lq, C = x.shape
    D = C // num_heads
    scale = D ** -0.5
    ctx_img = context[:, :257]
    ctx_txt = context[:, 257:]
    context_lens = context_lens.astype(jnp.int32)

    # Pad the (long) query axis once to a tile multiple; slice back at the very end.
    tl = min(seq_tile, _round_up(Lq, 8))
    Lp = _round_up(Lq, tl)
    if Lp != Lq:
        x = jnp.pad(x, ((0, 0), (0, Lp - Lq), (0, 0)))

    cd = compute_dtype
    cast = lambda t: t.astype(cd)

    # q projection + RMSNorm; D**-0.5 softmax scale folded into gamma_q host-side.
    q = _proj(cast(x), cast(params["wq_t"]), params["bq"], params["gq"] * scale,
              do_norm=True, eps=eps, tl=tl, tk=tk, out_dtype=cd,
              vmem_limit=vmem_limit_bytes)

    # Fused text K/V projection (one matmul against [C, 2C] concat weight).
    wkv_t = jnp.concatenate([params["wk_t"], params["wv_t"]], axis=1)
    bkv = jnp.concatenate([params["bk"], params["bv"]])
    k, v = _kv_proj(cast(ctx_txt), cast(wkv_t), bkv, params["gk"], eps=eps, tk=tk,
                    out_dtype=cd, vmem_limit=vmem_limit_bytes)

    # Fused image K/V projection.
    wkvi_t = jnp.concatenate([params["wki_t"], params["wvi_t"]], axis=1)
    bkvi = jnp.concatenate([params["bki"], params["bvi"]])
    k_img, v_img = _kv_proj(cast(ctx_img), cast(wkvi_t), bkvi, params["gki"], eps=eps,
                            tk=tk, out_dtype=cd, vmem_limit=vmem_limit_bytes)

    # Dual cross-attention directly on the flat [B, L, C] layout (heads via BlockSpec).
    # NOTE: context_lens[b] == 0 gives a uniform average over masked text keys (matches
    # the plain-softmax reference semantics).
    attn = _dual_cross_attention(q, k, v, k_img, v_img, context_lens,
                                 num_heads=num_heads, tq=tl,
                                 vmem_limit=vmem_limit_bytes)

    # Output projection (no norm); result in the input dtype.
    out = _proj(attn, cast(params["wo_t"]), params["bo"], None, do_norm=False,
                tl=tl, tk=tk, out_dtype=x.dtype, vmem_limit=vmem_limit_bytes)
    return out[:, :Lq]


# ---------------------------------------------------------------------------
# Pure-JAX reference mirroring the same mixed-precision math
# (bf16 matmul inputs, f32 accumulation / norm / softmax).
# ---------------------------------------------------------------------------
def _reference(x, context, context_lens, p, *, num_heads, eps=1e-6,
               compute_dtype=jnp.bfloat16):
    cd = compute_dtype
    f32 = jnp.float32

    def mm(a, b):   # bf16-input, f32-accumulate matmul (bf16 products are exact in f32)
        return jnp.matmul(a.astype(cd).astype(f32), b.astype(cd).astype(f32))

    def rms(y, g):
        ms = jnp.mean(y * y, axis=-1, keepdims=True)
        return y * lax.rsqrt(ms + eps) * g

    B, Lq, C = x.shape
    D = C // num_heads
    scale = D ** -0.5
    ctx_img = context[:, :257]
    ctx_txt = context[:, 257:]

    q = rms(mm(x, p["wq_t"]) + p["bq"], p["gq"] * scale).astype(cd)
    k = rms(mm(ctx_txt, p["wk_t"]) + p["bk"], p["gk"]).astype(cd)
    v = (mm(ctx_txt, p["wv_t"]) + p["bv"]).astype(cd)
    k_img = rms(mm(ctx_img, p["wki_t"]) + p["bki"], p["gki"]).astype(cd)
    v_img = (mm(ctx_img, p["wvi_t"]) + p["bvi"]).astype(cd)

    def heads(t):
        return t.reshape(t.shape[0], t.shape[1], num_heads, D).transpose(0, 2, 1, 3)

    qh, kh, vh, kih, vih = (heads(t).astype(f32) for t in (q, k, v, k_img, v_img))

    s_t = jnp.einsum("bhqd,bhkd->bhqk", qh, kh)
    key_idx = jnp.arange(s_t.shape[-1])[None, None, None, :]
    s_t = jnp.where(key_idx < context_lens[:, None, None, None], s_t, -1e30)
    p_t = jnp.exp(s_t - jnp.max(s_t, axis=-1, keepdims=True))
    a_t = jnp.einsum("bhqk,bhkd->bhqd", p_t.astype(cd).astype(f32), vh) \
        / jnp.sum(p_t, axis=-1, keepdims=True)

    s_i = jnp.einsum("bhqd,bhkd->bhqk", qh, kih)
    p_i = jnp.exp(s_i - jnp.max(s_i, axis=-1, keepdims=True))
    a_i = jnp.einsum("bhqk,bhkd->bhqd", p_i.astype(cd).astype(f32), vih) \
        / jnp.sum(p_i, axis=-1, keepdims=True)

    a = (a_t + a_i).transpose(0, 2, 1, 3).reshape(B, Lq, C)
    return mm(a, p["wo_t"]) + p["bo"]


if __name__ == "__main__":
    # Small, forward-consistent shapes. head_dim=128 matches Wan and keeps the
    # head-sliced attention blocks lane-aligned (last block dim = 128).
    B = 2
    num_heads = 2
    head_dim = 128
    dim = num_heads * head_dim          # C = 256
    Lq = 16                             # query tokens (multiple of 8)
    L_txt = 64                          # text-context tokens
    L_ctx = 257 + L_txt                 # module hard-codes 257 image-context tokens

    key = jax.random.PRNGKey(0)
    keys = jax.random.split(key, 18)

    x = jax.random.normal(keys[0], (B, Lq, dim), dtype=jnp.float32)
    context = jax.random.normal(keys[1], (B, L_ctx, dim), dtype=jnp.float32)
    context_lens = jnp.array([L_txt, 40], dtype=jnp.int32)   # ragged text lengths

    def linear_params(kw, kb):
        bound = 1.0 / math.sqrt(dim)
        w_t = jax.random.uniform(kw, (dim, dim), minval=-bound, maxval=bound,
                                 dtype=jnp.float32)          # pre-transposed (in, out)
        b = jax.random.uniform(kb, (dim,), minval=-bound, maxval=bound,
                               dtype=jnp.float32)
        return w_t, b

    wq_t, bq = linear_params(keys[2], keys[3])
    wk_t, bk = linear_params(keys[4], keys[5])
    wv_t, bv = linear_params(keys[6], keys[7])
    wki_t, bki = linear_params(keys[8], keys[9])
    wvi_t, bvi = linear_params(keys[10], keys[11])
    wo_t, bo = linear_params(keys[12], keys[13])
    gq = 1.0 + 0.1 * jax.random.normal(keys[14], (dim,), dtype=jnp.float32)
    gk = 1.0 + 0.1 * jax.random.normal(keys[15], (dim,), dtype=jnp.float32)
    gki = 1.0 + 0.1 * jax.random.normal(keys[16], (dim,), dtype=jnp.float32)

    params = dict(wq_t=wq_t, bq=bq, gq=gq, wk_t=wk_t, bk=bk, gk=gk,
                  wv_t=wv_t, bv=bv, wki_t=wki_t, bki=bki, gki=gki,
                  wvi_t=wvi_t, bvi=bvi, wo_t=wo_t, bo=bo)

    out = wan_i2v_cross_attention(x, context, context_lens, params,
                                  num_heads=num_heads, eps=1e-6)
    out = jax.block_until_ready(out)

    ref = _reference(x, context, context_lens, params, num_heads=num_heads, eps=1e-6)
    assert out.shape == (B, Lq, dim)
    err = float(jnp.max(jnp.abs(out - ref)))
    assert jnp.allclose(out, ref, atol=2e-2, rtol=2e-2), err

    print("KERNEL_OK")
</pallas_src>

<mosaic_0001>
module attributes {stable_mosaic.version = 11 : i64} {
  func.func @_proj_kernel(%arg0: i32, %arg1: i32, %arg2: i32, %arg3: memref<1x16x256xbf16, #tpu.memory_space<vmem>>, %arg4: memref<256x256xbf16, #tpu.memory_space<vmem>>, %arg5: memref<1x256xf32, #tpu.memory_space<vmem>>, %arg6: memref<1x256xf32, #tpu.memory_space<vmem>>, %arg7: memref<1x16x256xbf16, #tpu.memory_space<vmem>>, %arg8: memref<16x256xf32, #tpu.memory_space<vmem>>) attributes {dimension_semantics = [#tpu.dimension_semantics<parallel>, #tpu.dimension_semantics<parallel>, #tpu.dimension_semantics<arbitrary>], iteration_bounds = array<i64: 2, 1, 1>, scalar_prefetch = 0 : i64, scratch_operands = 1 : i64, tpu.core_type = #tpu.core_type<tc>, window_params = [{transform_indices = @transform_0, window_bounds = array<i64: 1, 16, 256>}, {transform_indices = @transform_1, window_bounds = array<i64: 256, 256>}, {pipeline_mode = #tpu.pipeline_mode<synchronous>, transform_indices = @transform_2, window_bounds = array<i64: 1, 256>}, {pipeline_mode = #tpu.pipeline_mode<synchronous>, transform_indices = @transform_3, window_bounds = array<i64: 1, 256>}, {transform_indices = @transform_4, window_bounds = array<i64: 1, 16, 256>}]} {
    %c0_i32 = arith.constant 0 : i32
    %0 = arith.cmpi eq, %arg2, %c0_i32 : i32
    %1 = arith.extui %0 : i1 to i32
    %c0_i32_0 = arith.constant 0 : i32
    %2 = arith.cmpi ne, %1, %c0_i32_0 : i32
    scf.if %2 {
      %cst_11 = arith.constant 0.000000e+00 : f32
      %13 = vector.broadcast %cst_11 : f32 to vector<16x256xf32>
      %c0_12 = arith.constant 0 : index
      %c0_13 = arith.constant 0 : index
      %14 = vector.load %arg8[%c0_12, %c0_13] : memref<16x256xf32, #tpu.memory_space<vmem>>, vector<16x256xf32>
      tpu.vector_store %arg8[%c0_12, %c0_13], %13 {strides = array<i32>} : memref<16x256xf32, #tpu.memory_space<vmem>>, vector<16x256xf32>,
    } else {
    }
    %c0 = arith.constant 0 : index
    %c0_1 = arith.constant 0 : index
    %3 = vector.load %arg8[%c0, %c0_1] : memref<16x256xf32, #tpu.memory_space<vmem>>, vector<16x256xf32>
    %c0_2 = arith.constant 0 : index
    %c0_3 = arith.constant 0 : index
    %c0_4 = arith.constant 0 : index
    %4 = vector.load %arg3[%c0_2, %c0_3, %c0_4] : memref<1x16x256xbf16, #tpu.memory_space<vmem>>, vector<1x16x256xbf16>
    %5 = vector.shape_cast %4 : vector<1x16x256xbf16> to vector<16x256xbf16>
    %c0_5 = arith.constant 0 : index
    %c0_6 = arith.constant 0 : index
    %6 = vector.load %arg4[%c0_5, %c0_6] : memref<256x256xbf16, #tpu.memory_space<vmem>>, vector<256x256xbf16>
    %cst = arith.constant dense<0.000000e+00> : vector<16x256xf32>
    %7 = tpu.matmul %5, %6, %cst {dimension_numbers = #tpu.dot_dimension_numbers<[1], [0], [0], [1], [0, 0, 1, 1], [], []>} : vector<16x256xbf16>, vector<256x256xbf16>, vector<16x256xf32> -> vector<16x256xf32>
    %8 = arith.addf %3, %7 : vector<16x256xf32>
    %c0_7 = arith.constant 0 : index
    %c0_8 = arith.constant 0 : index
    %9 = vector.load %arg8[%c0_7, %c0_8] : memref<16x256xf32, #tpu.memory_space<vmem>>, vector<16x256xf32>
    tpu.vector_store %arg8[%c0_7, %c0_8], %8 {strides = array<i32>} : memref<16x256xf32, #tpu.memory_space<vmem>>, vector<16x256xf32>,
    %c0_i32_9 = arith.constant 0 : i32
    %10 = arith.cmpi eq, %arg2, %c0_i32_9 : i32
    %11 = arith.extui %10 : i1 to i32
    %c0_i32_10 = arith.constant 0 : i32
    %12 = arith.cmpi ne, %11, %c0_i32_10 : i32
    scf.if %12 {
      %c0_11 = arith.constant 0 : index
      %c0_12 = arith.constant 0 : index
      %13 = vector.load %arg8[%c0_11, %c0_12] : memref<16x256xf32, #tpu.memory_space<vmem>>, vector<16x256xf32>
      %c0_13 = arith.constant 0 : index
      %c0_14 = arith.constant 0 : index
      %14 = vector.load %arg5[%c0_13, %c0_14] : memref<1x256xf32, #tpu.memory_space<vmem>>, vector<1x256xf32>
      %15 = vector.shape_cast %14 : vector<1x256xf32> to vector<256xf32>
      %16 = vector.shape_cast %15 : vector<256xf32> to vector<1x256xf32>
      %17 = vector.broadcast %16 : vector<1x256xf32> to vector<16x256xf32>
      %18 = arith.addf %13, %17 : vector<16x256xf32>
      %19 = arith.mulf %18, %18 : vector<16x256xf32>
      %cst_15 = arith.constant dense<0.000000e+00> : vector<16xf32>
      %20 = vector.multi_reduction <add>, %19, %cst_15 [1] : vector<16x256xf32> to vector<16xf32>
      %21 = vector.shape_cast %20 : vector<16xf32> to vector<16x1xf32>
      %cst_16 = arith.constant 2.560000e+02 : f32
      %22 = vector.broadcast %cst_16 : f32 to vector<16x1xf32>
      %23 = arith.divf %21, %22 : vector<16x1xf32>
      %cst_17 = arith.constant 9.99999997E-7 : f32
      %24 = vector.broadcast %cst_17 : f32 to vector<16x1xf32>
      %25 = arith.addf %23, %24 : vector<16x1xf32>
      %26 = math.rsqrt %25 : vector<16x1xf32>
      %27 = vector.broadcast %26 : vector<16x1xf32> to vector<16x256xf32>
      %28 = arith.mulf %18, %27 : vector<16x256xf32>
      %c0_18 = arith.constant 0 : index
      %c0_19 = arith.constant 0 : index
      %29 = vector.load %arg6[%c0_18, %c0_19] : memref<1x256xf32, #tpu.memory_space<vmem>>, vector<1x256xf32>
      %30 = vector.shape_cast %29 : vector<1x256xf32> to vector<256xf32>
      %31 = vector.shape_cast %30 : vector<256xf32> to vector<1x256xf32>
      %32 = vector.broadcast %31 : vector<1x256xf32> to vector<16x256xf32>
      %33 = arith.mulf %28, %32 : vector<16x256xf32>
      %34 = arith.truncf %33 : vector<16x256xf32> to vector<16x256xbf16>
      %c0_20 = arith.constant 0 : index
      %c0_21 = arith.constant 0 : index
      %c0_22 = arith.constant 0 : index
      %35 = vector.load %arg7[%c0_20, %c0_21, %c0_22] : memref<1x16x256xbf16, #tpu.memory_space<vmem>>, vector<1x16x256xbf16>
      %36 = vector.shape_cast %35 : vector<1x16x256xbf16> to vector<16x256xbf16>
      %37 = vector.shape_cast %34 : vector<16x256xbf16> to vector<1x16x256xbf16>
      tpu.vector_store %arg7[%c0_20, %c0_21, %c0_22], %37 {strides = array<i32>} : memref<1x16x256xbf16, #tpu.memory_space<vmem>>, vector<1x16x256xbf16>,
    } else {
    }
    return
  }
  func.func @transform_0(%arg0: i32, %arg1: i32, %arg2: i32) -> (i32, i32, i32) {
    %c0_i32 = arith.constant 0 : i32
    return %arg0, %arg1, %arg2 : i32, i32, i32
  }
  func.func @transform_1(%arg0: i32, %arg1: i32, %arg2: i32) -> (i32, i32) {
    %c0_i32 = arith.constant 0 : i32
    %c0_i32_0 = arith.constant 0 : i32
    return %arg2, %c0_i32 : i32, i32
  }
  func.func @transform_2(%arg0: i32, %arg1: i32, %arg2: i32) -> (i32, i32) {
    %c0_i32 = arith.constant 0 : i32
    %c0_i32_0 = arith.constant 0 : i32
    %c0_i32_1 = arith.constant 0 : i32
    return %c0_i32, %c0_i32_0 : i32, i32
  }
  func.func @transform_3(%arg0: i32, %arg1: i32, %arg2: i32) -> (i32, i32) {
    %c0_i32 = arith.constant 0 : i32
    %c0_i32_0 = arith.constant 0 : i32
    %c0_i32_1 = arith.constant 0 : i32
    return %c0_i32, %c0_i32_0 : i32, i32
  }
  func.func @transform_4(%arg0: i32, %arg1: i32, %arg2: i32) -> (i32, i32, i32) {
    %c0_i32 = arith.constant 0 : i32
    %c0_i32_0 = arith.constant 0 : i32
    return %arg0, %arg1, %c0_i32 : i32, i32, i32
  }
}

</mosaic_0001>

<llo_original>
// kernel: tpu_custom_call.1
$region0: #{tpu_custom_call.1}
  #allocation0 [shape = 'u32[]', space=smem, size = 0x4, offset = 0x4, fixed_abs, tag = 'smem constant byte address 0x4 - core index']
  #allocation1 [shape = 'u32[144,128]{1,0:T(1,128)}', space=vmem, size = 0x12000, scoped, tag = 'internal scratch']
  #allocation2 [shape = 'f32[16,256]{1,0:T(8,128)}', space=vmem, size = 0x4000, scoped, tag = 'scratch operand']
  %s0 = inlined_call_operand.hbm [shape: bf16[2,16,256], index: 0, kind: input, shape index: {}]
  %s1 = inlined_call_operand.hbm [shape: bf16[256,256], index: 1, kind: input, shape index: {}]
  %s2 = inlined_call_operand.vmem [shape: f32[1,256], index: 2, kind: input, shape index: {}]
  %s3 = inlined_call_operand.vmem [shape: f32[1,256], index: 3, kind: input, shape index: {}]
  %s4 = inlined_call_operand.hbm [shape: bf16[2,16,256], index: 4, kind: output, shape index: {}]
  %s5 = sld [smem:[#allocation0]]
  $region65: #{tpu_custom_call.1} parent=0
    _
  %s7 = ssub.s32 1, %s5
  %s8 = scalar_select 0, %s7, %s5
  $region1: #{tpu_custom_call.1} parent=0
    #allocation3 [shape = 'u8[16384]{0}', space=vmem, size = 0x4000, scoped, tag = 'input window, operand 0']
    #allocation4 [shape = 's32[2]{0}', space=sflag, size = 0x8, scoped, tag = 'scoped memory for tpu_custom_call.1']
    #allocation5 [shape = 's32[2]{0}', space=sflag, size = 0x8, scoped, tag = 'scoped memory for tpu_custom_call.1']
    #allocation6 [shape = 'u8[131072]{0}', space=vmem, size = 0x20000, scoped, tag = 'input window, operand 1, single buffered']
    #allocation7 [shape = 's32[1]{0}', space=sflag, size = 0x4, scoped, tag = 'scoped memory for tpu_custom_call.1']
    #allocation8 [shape = 'u8[16384]{0}', space=vmem, size = 0x4000, scoped, tag = 'output window, operand 0']
    %9 = vsyncpa [#allocation4], 0
    %s10 = scalar_lea.sflag [#allocation4], 1
    %11 = vsyncpa %s10, 0
    %12 = vsyncpa [#allocation7], 0
    %13 = vsyncpa [#allocation5], 0
    %s14 = scalar_lea.sflag [#allocation5], 1
    %15 = vsyncpa %s14, 0
    loop: start=0, step=1, limit=4
    $region2: #{tpu_custom_call.1} parent=1 // loop_pre_header
      _
    $region3: #{tpu_custom_call.1} parent=1 // loop_header
      %s17 = sphi 0, %s21
      %p18 = scmp.ge.s32.totalorder %s17, 4
      %s24 = sphi 0, %s43
      %s25 = sphi 0, %s39
      %s26 = sphi 0, %s35
      %s27 = sphi 0, %s24
      %s28 = sphi 0, %s25
      %s29 = sphi 0, %s26
      %s30 = sphi 0, %s27
      %s31 = sphi 0, %s28
      %s32 = sphi 0, %s29
      %s50 = sphi 0, %s52
      %s53 = sphi 0, %s50
      %s54 = sphi 0, %s53
      %s70 = sphi 0, %s54
      %s76 = sphi 0, %s78
      %s79 = sphi 0, %s76
      %s80 = sphi 0, %s79
      %s96 = sphi 0, %s80
      %s100 = sphi 0, %s100
      %s102 = sphi 0, %s100
      %s103 = sphi 0, %s102
      %s117 = sphi 0, %s103
      %s121 = sphi 0, %s121
      %s123 = sphi 0, %s121
      %s124 = sphi 0, %s123
      %s138 = sphi 0, %s124
      %s146 = sphi 0, %s148
      %s149 = sphi 0, %s146
      %s150 = sphi 0, %s149
      %s166 = sphi 0, %s150
    $region4: #{tpu_custom_call.1} parent=1 // loop_header_branch
      %20 = sbr.rel (%p18) target = $region8
    $region5: #{tpu_custom_call.1} parent=1 // loop_body
      %s22 = ssub.s32 %s17, 1
      %s23 = ssub.s32 %s17, 2
      %s33 = sadd.s32 1, %s26
      %p34 = scmp.ge.s32.totalorder %s33, 1
      %s35 = scalar_select %p34, 0, %s33
      %s36 = sadd.s32 1, %s25
      %s37 = scalar_select %p34, %s36, %s25
      %p38 = scmp.ge.s32.totalorder %s37, 1
      %s39 = scalar_select %p38, 0, %s37
      %s40 = sadd.s32 1, %s24
      %s41 = scalar_select %p38, %s40, %s24
      %p42 = scmp.ge.s32.totalorder %s41, 2
      %s43 = scalar_select %p42, 0, %s41
      %s44 = ssub.s32 %s24, %s43
      %s45 = ssub.s32 %s25, %s39
      %s46 = sor.u32 %s44, %s45
      %s47 = ssub.s32 %s26, %s35
      %s48 = sor.u32 %s46, %s47
      %p49 = scmp.eq.s32.totalorder %s48, 0
      %s51 = sadd.s32 %s50, 1
      %s52 = scalar_select %p49, %s50, %s51
      %p55 = pneg %p49
      %p56 = scmp.eq.s32.totalorder %s17, 1
      %p57 = por %p55, %p56
      %p58 = scmp.ne.s32.totalorder %s50, %s53
      %p59 = scmp.eq.s32.totalorder %s17, 0
      %p60 = por %p58, %p59
      %p61 = scmp.ne.s32.totalorder %s50, %s53
      %p62 = scmp.eq.s32.totalorder %s22, 1
      %p63 = por %p61, %p62
      %p64 = scmp.ne.s32.totalorder %s53, %s54
      %p65 = scmp.eq.s32.totalorder %s22, 0
      %p66 = por %p64, %p65
      %p67 = scmp.ne.s32.totalorder %s53, %s54
      %p68 = scmp.eq.s32.totalorder %s23, 1
      %p69 = por %p67, %p68
      %p71 = scmp.ne.s32.totalorder %s54, %s70
      %p72 = scmp.eq.s32.totalorder %s23, 0
      %p73 = por %p71, %p72
      %s74 = ssub.s32 %s26, %s35
      %p75 = scmp.eq.s32.totalorder %s74, 0
      %s77 = sadd.s32 %s76, 1
      %s78 = scalar_select %p75, %s76, %s77
      %p81 = pneg %p75
      %p82 = scmp.eq.s32.totalorder %s17, 1
      %p83 = por %p81, %p82
      %p84 = scmp.ne.s32.totalorder %s76, %s79
      %p85 = scmp.eq.s32.totalorder %s17, 0
      %p86 = por %p84, %p85
      %p87 = scmp.ne.s32.totalorder %s76, %s79
      %p88 = scmp.eq.s32.totalorder %s22, 1
      %p89 = por %p87, %p88
      %p90 = scmp.ne.s32.totalorder %s79, %s80
      %p91 = scmp.eq.s32.totalorder %s22, 0
      %p92 = por %p90, %p91
      %p93 = scmp.ne.s32.totalorder %s79, %s80
      %p94 = scmp.eq.s32.totalorder %s23, 1
      %p95 = por %p93, %p94
      %p97 = scmp.ne.s32.totalorder %s80, %s96
      %p98 = scmp.eq.s32.totalorder %s23, 0
      %p99 = por %p97, %p98
      %s101 = sadd.s32 %s100, 1
      %p104 = scmp.eq.s32.totalorder %s17, 1
      %p105 = scmp.ne.s32.totalorder %s100, %s102
      %p106 = scmp.eq.s32.totalorder %s17, 0
      %p107 = por %p105, %p106
      %p108 = scmp.ne.s32.totalorder %s100, %s102
      %p109 = scmp.eq.s32.totalorder %s22, 1
      %p110 = por %p108, %p109
      %p111 = scmp.ne.s32.totalorder %s102, %s103
      %p112 = scmp.eq.s32.totalorder %s22, 0
      %p113 = por %p111, %p112
      %p114 = scmp.ne.s32.totalorder %s102, %s103
      %p115 = scmp.eq.s32.totalorder %s23, 1
      %p116 = por %p114, %p115
      %p118 = scmp.ne.s32.totalorder %s103, %s117
      %p119 = scmp.eq.s32.totalorder %s23, 0
      %p120 = por %p118, %p119
      %s122 = sadd.s32 %s121, 1
      %p125 = scmp.eq.s32.totalorder %s17, 1
      %p126 = scmp.ne.s32.totalorder %s121, %s123
      %p127 = scmp.eq.s32.totalorder %s17, 0
      %p128 = por %p126, %p127
      %p129 = scmp.ne.s32.totalorder %s121, %s123
      %p130 = scmp.eq.s32.totalorder %s22, 1
      %p131 = por %p129, %p130
      %p132 = scmp.ne.s32.totalorder %s123, %s124
      %p133 = scmp.eq.s32.totalorder %s22, 0
      %p134 = por %p132, %p133
      %p135 = scmp.ne.s32.totalorder %s123, %s124
      %p136 = scmp.eq.s32.totalorder %s23, 1
      %p137 = por %p135, %p136
      %p139 = scmp.ne.s32.totalorder %s124, %s138
      %p140 = scmp.eq.s32.totalorder %s23, 0
      %p141 = por %p139, %p140
      %s142 = ssub.s32 %s24, %s43
      %s143 = ssub.s32 %s25, %s39
      %s144 = sor.u32 %s142, %s143
      %p145 = scmp.eq.s32.totalorder %s144, 0
      %s147 = sadd.s32 %s146, 1
      %s148 = scalar_select %p145, %s146, %s147
      %p151 = pneg %p145
      %p152 = scmp.eq.s32.totalorder %s17, 1
      %p153 = por %p151, %p152
      %p154 = scmp.ne.s32.totalorder %s146, %s149
      %p155 = scmp.eq.s32.totalorder %s17, 0
      %p156 = por %p154, %p155
      %p157 = scmp.ne.s32.totalorder %s146, %s149
      %p158 = scmp.eq.s32.totalorder %s22, 1
      %p159 = por %p157, %p158
      %p160 = scmp.ne.s32.totalorder %s149, %s150
      %p161 = scmp.eq.s32.totalorder %s22, 0
      %p162 = por %p160, %p161
      %p163 = scmp.ne.s32.totalorder %s149, %s150
      %p164 = scmp.eq.s32.totalorder %s23, 1
      %p165 = por %p163, %p164
      %p167 = scmp.ne.s32.totalorder %s150, %s166
      %p168 = scmp.eq.s32.totalorder %s23, 0
      %p169 = por %p167, %p168
      %p170 = scmp.le.s32.totalorder 1, %s17
      %p171 = scmp.lt.s32.totalorder %s17, 3
      %p172 = pnand %p170, %p171
      %p173 = pneg %p172
      // Predicated region
      $region9: #{tpu_custom_call.1} parent=5 // pred_check
        _
      $region10: #{tpu_custom_call.1} parent=5 // pred_check_branch
        %175 = sbr.rel (%p172) target = $region12
      $region11: #{tpu_custom_call.1} parent=5 // pred_region
        %s176 = ssub.s32 %s17, 1
        // Predicated region
        $region13: #{tpu_custom_call.1} parent=11 // pred_check
          %p177 = pneg %p92
        $region14: #{tpu_custom_call.1} parent=11 // pred_check_branch
          %179 = sbr.rel (%p177) target = $region16
        $region15: #{tpu_custom_call.1} parent=11 // pred_region
          %s180 = smul.u32 32, %s29
          %s182 = ssub.s32 4096, 4096
          %183 = vsyncadd [#allocation7], %s182
          %s184 = smul.addr %s180, 2
          %s185 = smul.addr %s184, 64
          %s186 = scalar_lea.hbm %s1, %s185
          %s187 = sshll.u32 [#allocation6], 4
          %s188 = int_to_ptr.vmem [resolvable:$true] %s187
          %193 = dma.hbm_to_vmem [thread:$0]  %s186, 4096, %s188, [#allocation7], 128, 128, 8
        $region16: #{tpu_custom_call.1} parent=11 // pred_fallthru
          _
        // Predicated region
        $region17: #{tpu_custom_call.1} parent=11 // pred_check
          %p194 = pneg %p113
        $region18: #{tpu_custom_call.1} parent=11 // pred_check_branch
          %196 = sbr.rel (%p194) target = $region20
        $region19: #{tpu_custom_call.1} parent=11 // pred_region
          _
        $region20: #{tpu_custom_call.1} parent=11 // pred_fallthru
          _
        // Predicated region
        $region21: #{tpu_custom_call.1} parent=11 // pred_check
          %p197 = pneg %p134
        $region22: #{tpu_custom_call.1} parent=11 // pred_check_branch
          %199 = sbr.rel (%p197) target = $region24
        $region23: #{tpu_custom_call.1} parent=11 // pred_region
          _
        $region24: #{tpu_custom_call.1} parent=11 // pred_fallthru
          _
      $region12: #{tpu_custom_call.1} parent=5 // pred_fallthru
        _
      %p200 = scmp.lt.s32.totalorder %s17, 2
      // Predicated region
      $region25: #{tpu_custom_call.1} parent=5 // pred_check
        %p201 = pneg %p200
      $region26: #{tpu_custom_call.1} parent=5 // pred_check_branch
        %203 = sbr.rel (%p201) target = $region28
      $region27: #{tpu_custom_call.1} parent=5 // pred_region
        // Predicated region
        $region29: #{tpu_custom_call.1} parent=27 // pred_check
          %p204 = pneg %p60
        $region30: #{tpu_custom_call.1} parent=27 // pred_check_branch
          %206 = sbr.rel (%p204) target = $region32
        $region31: #{tpu_custom_call.1} parent=27 // pred_region
          %s207 = sand.u32 %s50, 1
          %s208 = scalar_lea.sflag [#allocation4], %s207
          %s209 = sand.u32 %s50, 1
          %s210 = smul.addr %s209, 16
          %s211 = scalar_lea.vmem [#allocation3], %s210
          %s212 = smul.u32 2, %s25
          %s213 = smul.u32 2, %s26
          %s215 = ssub.s32 256, 256
          %216 = vsyncadd %s208, %s215
          %s217 = smul.addr %s212, 2
          %s218 = sadd.s32 %s213, %s217
          %s219 = smul.addr %s24, 4
          %s220 = sadd.s32 %s218, %s219
          %s221 = smul.addr %s220, 64
          %s222 = scalar_lea.hbm %s0, %s221
          %s223 = sshll.u32 %s211, 4
          %s224 = int_to_ptr.vmem [resolvable:$true] %s223
          %229 = dma.hbm_to_vmem [thread:$0]  %s222, 256, %s224, %s208, 128, 128, 8
        $region32: #{tpu_custom_call.1} parent=27 // pred_fallthru
          _
      $region28: #{tpu_custom_call.1} parent=5 // pred_fallthru
        _
      %p230 = scmp.le.s32.totalorder 1, %s17
      %p231 = scmp.lt.s32.totalorder %s17, 3
      %p232 = pnand %p230, %p231
      %p233 = pneg %p232
      // Predicated region
      $region33: #{tpu_custom_call.1} parent=5 // pred_check
        _
      $region34: #{tpu_custom_call.1} parent=5 // pred_check_branch
        %235 = sbr.rel (%p232) target = $region36
      $region35: #{tpu_custom_call.1} parent=5 // pred_region
        %s236 = ssub.s32 %s17, 1
        %s237 = sand.u32 %s53, 1
        %s238 = scalar_lea.sflag [#allocation4], %s237
        %s239 = sand.u32 %s53, 1
        %s240 = smul.addr %s239, 16
        %s241 = scalar_lea.vmem [#allocation3], %s240
        // Predicated region
        $region37: #{tpu_custom_call.1} parent=35 // pred_check
          %p242 = pneg %p66
        $region38: #{tpu_custom_call.1} parent=35 // pred_check_branch
          %244 = sbr.rel (%p242) target = $region40
        $region39: #{tpu_custom_call.1} parent=35 // pred_region
          %245 = dma.done %s238, 256
        $region40: #{tpu_custom_call.1} parent=35 // pred_fallthru
          _
        // Predicated region
        $region41: #{tpu_custom_call.1} parent=35 // pred_check
          %p246 = pneg %p92
        $region42: #{tpu_custom_call.1} parent=35 // pred_check_branch
          %248 = sbr.rel (%p246) target = $region44
        $region43: #{tpu_custom_call.1} parent=35 // pred_region
          %249 = dma.done [#allocation7], 4096
        $region44: #{tpu_custom_call.1} parent=35 // pred_fallthru
          _
        %s250 = sand.u32 %s53, 1
        %s251 = scalar_lea.sflag [#allocation4], %s250
        %s252 = sand.u32 %s53, 1
        %s253 = smul.addr %s252, 16
        %s254 = scalar_lea.vmem [#allocation3], %s253
        %p255 = pneg %p66
        %p256 = pneg %p63
        %p257 = pneg %p92
        %p258 = pneg %p89
        %p259 = pneg %p113
        %p260 = pneg %p110
        %p261 = pneg %p134
        %p262 = pneg %p131
        %p263 = pneg %p162
        %p264 = pneg %p159
        %s265 = sand.u32 %s149, 1
        %s266 = scalar_lea.sflag [#allocation5], %s265
        %s267 = sand.u32 %s149, 1
        %s268 = smul.addr %s267, 16
        %s269 = scalar_lea.vmem [#allocation8], %s268
        %s270 = smul.u32 2, %s28
        %s271 = smul.u32 2, %s29
        %s272 = smul.u32 32, %s29
        %s273 = smul.u32 2, %s28
        %p274 = scmp.eq.s32.totalorder %s29, 0
        // Predicated region
        $region45: #{tpu_custom_call.1} parent=35 // pred_check
          %p275 = pneg %p274
        $region46: #{tpu_custom_call.1} parent=35 // pred_check_branch
          %277 = sbr.rel (%p275) target = $region48
        $region47: #{tpu_custom_call.1} parent=35 // pred_region
          %278 = vst [vmem:[#allocation2] sm:$0xff] 0.0
          %279 = vst [vmem:[#allocation2 + $0x8] sm:$0xff] 0.0
          %280 = vst [vmem:[#allocation2 + $0x10] sm:$0xff] 0.0
          %281 = vst [vmem:[#allocation2 + $0x18] sm:$0xff] 0.0
        $region48: #{tpu_custom_call.1} parent=35 // pred_fallthru
          _
        %v282 = vld [vmem:[#allocation2] sm:$0xff]
        %v283 = vld [vmem:[#allocation2 + $0x8] sm:$0xff]
        %v284 = vld [vmem:[#allocation2 + $0x10] sm:$0xff]
        %v285 = vld [vmem:[#allocation2 + $0x18] sm:$0xff]
        %v286 = vld [vmem:[%s241] sm:$0xff]
        %v287 = vld [vmem:[%s241 + $0x8] sm:$0xff]
        %v288 = vld [vmem:[#allocation6] sm:$0xff]
        %v289 = vld [vmem:[#allocation6 + $0x8] sm:$0xff]
        %v290 = vld [vmem:[#allocation6 + $0x10] sm:$0xff]
        %v291 = vld [vmem:[#allocation6 + $0x18] sm:$0xff]
        %v292 = vld [vmem:[#allocation6 + $0x20] sm:$0xff]
        %v293 = vld [vmem:[#allocation6 + $0x28] sm:$0xff]
        %v294 = vld [vmem:[#allocation6 + $0x30] sm:$0xff]
        %v295 = vld [vmem:[#allocation6 + $0x38] sm:$0xff]
        %v296 = vld [vmem:[#allocation6 + $0x40] sm:$0xff]
        %v297 = vld [vmem:[#allocation6 + $0x48] sm:$0xff]
        %v298 = vld [vmem:[#allocation6 + $0x50] sm:$0xff]
        %v299 = vld [vmem:[#allocation6 + $0x58] sm:$0xff]
        %v300 = vld [vmem:[#allocation6 + $0x60] sm:$0xff]
        %v301 = vld [vmem:[#allocation6 + $0x68] sm:$0xff]
        %v302 = vld [vmem:[#allocation6 + $0x70] sm:$0xff]
        %v303 = vld [vmem:[#allocation6 + $0x78] sm:$0xff]
        %v304 = vld [vmem:[#allocation6 + $0x80] sm:$0xff]
        %v305 = vld [vmem:[#allocation6 + $0x88] sm:$0xff]
        %v306 = vld [vmem:[#allocation6 + $0x90] sm:$0xff]
        %v307 = vld [vmem:[#allocation6 + $0x98] sm:$0xff]
        %v308 = vld [vmem:[#allocation6 + $0xa0] sm:$0xff]
        %v309 = vld [vmem:[#allocation6 + $0xa8] sm:$0xff]
        %v310 = vld [vmem:[#allocation6 + $0xb0] sm:$0xff]
        %v311 = vld [vmem:[#allocation6 + $0xb8] sm:$0xff]
        %v312 = vld [vmem:[#allocation6 + $0xc0] sm:$0xff]
        %v313 = vld [vmem:[#allocation6 + $0xc8] sm:$0xff]
        %v314 = vld [vmem:[#allocation6 + $0xd0] sm:$0xff]
        %v315 = vld [vmem:[#allocation6 + $0xd8] sm:$0xff]
        %v316 = vld [vmem:[#allocation6 + $0xe0] sm:$0xff]
        %v317 = vld [vmem:[#allocation6 + $0xe8] sm:$0xff]
        %v318 = vld [vmem:[#allocation6 + $0xf0] sm:$0xff]
        %v319 = vld [vmem:[#allocation6 + $0xf8] sm:$0xff]
        %v322 = vunpack.c.l.b16 %v286
        %v323 = vunpack.c.h.b16 %v286
        %v324 = vunpack.c.l.b16 %v287
        %v325 = vunpack.c.h.b16 %v287
        %v326 = vpack.c.b16 %v324, %v322
        %v327 = vpack.c.b16 %v325, %v323
        %v362 = vunpack.c.l.b16 %v288
        %v363 = vunpack.c.h.b16 %v288
        %v364 = vunpack.c.l.b16 %v289
        %v365 = vunpack.c.h.b16 %v289
        %v366 = vunpack.c.l.b16 %v290
        %v367 = vunpack.c.h.b16 %v290
        %v368 = vunpack.c.l.b16 %v291
        %v369 = vunpack.c.h.b16 %v291
        %v370 = vunpack.c.l.b16 %v292
        %v371 = vunpack.c.h.b16 %v292
        %v372 = vunpack.c.l.b16 %v293
        %v373 = vunpack.c.h.b16 %v293
        %v374 = vunpack.c.l.b16 %v294
        %v375 = vunpack.c.h.b16 %v294
        %v376 = vunpack.c.l.b16 %v295
        %v377 = vunpack.c.h.b16 %v295
        %v378 = vunpack.c.l.b16 %v296
        %v379 = vunpack.c.h.b16 %v296
        %v380 = vunpack.c.l.b16 %v297
        %v381 = vunpack.c.h.b16 %v297
        %v382 = vunpack.c.l.b16 %v298
        %v383 = vunpack.c.h.b16 %v298
        %v384 = vunpack.c.l.b16 %v299
        %v385 = vunpack.c.h.b16 %v299
        %v386 = vunpack.c.l.b16 %v300
        %v387 = vunpack.c.h.b16 %v300
        %v388 = vunpack.c.l.b16 %v301
        %v389 = vunpack.c.h.b16 %v301
        %v390 = vunpack.c.l.b16 %v302
        %v391 = vunpack.c.h.b16 %v302
        %v392 = vunpack.c.l.b16 %v303
        %v393 = vunpack.c.h.b16 %v303
        %v394 = vunpack.c.l.b16 %v304
        %v395 = vunpack.c.h.b16 %v304
        %v396 = vunpack.c.l.b16 %v305
        %v397 = vunpack.c.h.b16 %v305
        %v398 = vunpack.c.l.b16 %v306
        %v399 = vunpack.c.h.b16 %v306
        %v400 = vunpack.c.l.b16 %v307
        %v401 = vunpack.c.h.b16 %v307
        %v402 = vunpack.c.l.b16 %v308
        %v403 = vunpack.c.h.b16 %v308
        %v404 = vunpack.c.l.b16 %v309
        %v405 = vunpack.c.h.b16 %v309
        %v406 = vunpack.c.l.b16 %v310
        %v407 = vunpack.c.h.b16 %v310
        %v408 = vunpack.c.l.b16 %v311
        %v409 = vunpack.c.h.b16 %v311
        %v410 = vunpack.c.l.b16 %v312
        %v411 = vunpack.c.h.b16 %v312
        %v412 = vunpack.c.l.b16 %v313
        %v413 = vunpack.c.h.b16 %v313
        %v414 = vunpack.c.l.b16 %v314
        %v415 = vunpack.c.h.b16 %v314
        %v416 = vunpack.c.l.b16 %v315
        %v417 = vunpack.c.h.b16 %v315
        %v418 = vunpack.c.l.b16 %v316
        %v419 = vunpack.c.h.b16 %v316
        %v420 = vunpack.c.l.b16 %v317
        %v421 = vunpack.c.h.b16 %v317
        %v422 = vunpack.c.l.b16 %v318
        %v423 = vunpack.c.h.b16 %v318
        %v424 = vunpack.c.l.b16 %v319
        %v425 = vunpack.c.h.b16 %v319
        %v426 = vpack.c.b16 %v364, %v362
        %v427 = vpack.c.b16 %v365, %v363
        %v428 = vpack.c.b16 %v368, %v366
        %v429 = vpack.c.b16 %v369, %v367
        %v430 = vpack.c.b16 %v372, %v370
        %v431 = vpack.c.b16 %v373, %v371
        %v432 = vpack.c.b16 %v376, %v374
        %v433 = vpack.c.b16 %v377, %v375
        %v434 = vpack.c.b16 %v380, %v378
        %v435 = vpack.c.b16 %v381, %v379
        %v436 = vpack.c.b16 %v384, %v382
        %v437 = vpack.c.b16 %v385, %v383
        %v438 = vpack.c.b16 %v388, %v386
        %v439 = vpack.c.b16 %v389, %v387
        %v440 = vpack.c.b16 %v392, %v390
        %v441 = vpack.c.b16 %v393, %v391
        %v442 = vpack.c.b16 %v396, %v394
        %v443 = vpack.c.b16 %v397, %v395
        %v444 = vpack.c.b16 %v400, %v398
        %v445 = vpack.c.b16 %v401, %v399
        %v446 = vpack.c.b16 %v404, %v402
        %v447 = vpack.c.b16 %v405, %v403
        %v448 = vpack.c.b16 %v408, %v406
        %v449 = vpack.c.b16 %v409, %v407
        %v450 = vpack.c.b16 %v412, %v410
        %v451 = vpack.c.b16 %v413, %v411
        %v452 = vpack.c.b16 %v416, %v414
        %v453 = vpack.c.b16 %v417, %v415
        %v454 = vpack.c.b16 %v420, %v418
        %v455 = vpack.c.b16 %v421, %v419
        %v456 = vpack.c.b16 %v424, %v422
        %v457 = vpack.c.b16 %v425, %v423
        %490 = vmatprep.subr.bf16.mxu0 %v427
        %491 = vmatpush1.bf16.msra.mxu0 %v426
        %492 = vmatprep.subr.bf16.mxu0 %v429
        %493 = vmatpush1.bf16.msra.mxu0 %v428
        %494 = vmatprep.subr.bf16.mxu0 %v431
        %495 = vmatpush1.bf16.msra.mxu0 %v430
        %496 = vmatprep.subr.bf16.mxu0 %v433
        %497 = vmatpush1.bf16.msra.mxu0 %v432
        %498 = vmatprep.subr.bf16.mxu0 %v435
        %499 = vmatpush1.bf16.msra.mxu0 %v434
        %500 = vmatprep.subr.bf16.mxu0 %v437
        %501 = vmatpush1.bf16.msra.mxu0 %v436
        %502 = vmatprep.subr.bf16.mxu0 %v439
        %503 = vmatpush1.bf16.msra.mxu0 %v438
        %504 = vmatprep.subr.bf16.mxu0 %v441
        %505 = vmatpush1.bf16.msra.mxu0 %v440
        %506 = vmatprep.subr.bf16.mxu0 %v443
        %507 = vmatpush1.bf16.msra.mxu0 %v442
        %508 = vmatprep.subr.bf16.mxu0 %v445
        %509 = vmatpush1.bf16.msra.mxu0 %v444
        %510 = vmatprep.subr.bf16.mxu0 %v447
        %511 = vmatpush1.bf16.msra.mxu0 %v446
        %512 = vmatprep.subr.bf16.mxu0 %v449
        %513 = vmatpush1.bf16.msra.mxu0 %v448
        %514 = vmatprep.subr.bf16.mxu0 %v451
        %515 = vmatpush1.bf16.msra.mxu0 %v450
        %516 = vmatprep.subr.bf16.mxu0 %v453
        %517 = vmatpush1.bf16.msra.mxu0 %v452
        %518 = vmatprep.subr.bf16.mxu0 %v455
        %519 = vmatpush1.bf16.msra.mxu0 %v454
        %520 = vmatprep.subr.bf16.mxu0 %v457
        %521 = vmatpush1.bf16.msra.mxu0 %v456
        %522 = vmatprep.mubr.bf16.mxu0 %v327
        %523 = vmatmul.mubr.bf16.gmra.mrb[0].mxu0 %v326
        %v524 = vpop.f32.mrb[0].mxu0
        %v525 = vadd.f32 0.0, %v524
        %v526 = vpop.f32.mrb[0].mxu0
        %v527 = vadd.f32 0.0, %v526
        %v528 = vpop.f32.mrb[0].mxu0
        %v529 = vadd.f32 0.0, %v528
        %v530 = vpop.f32.mrb[0].mxu0
        %v531 = vadd.f32 0.0, %v530
        %532 = vdwg.mxu0
        %v533 = vadd.f32 %v282, %v525
        %v534 = vadd.f32 %v283, %v527
        %v535 = vadd.f32 %v284, %v529
        %v536 = vadd.f32 %v285, %v531
        %537 = vst [vmem:[#allocation2] sm:$0xff] %v533
        %538 = vst [vmem:[#allocation2 + $0x8] sm:$0xff] %v534
        %539 = vst [vmem:[#allocation2 + $0x10] sm:$0xff] %v535
        %540 = vst [vmem:[#allocation2 + $0x18] sm:$0xff] %v536
        // Predicated region
        $region49: #{tpu_custom_call.1} parent=35 // pred_check
          %p541 = pneg %p274
        $region50: #{tpu_custom_call.1} parent=35 // pred_check_branch
          %543 = sbr.rel (%p541) target = $region52
        $region51: #{tpu_custom_call.1} parent=35 // pred_region
          %v544 = vld [vmem:[#allocation2] sm:$0xff]
          %v545 = vld [vmem:[#allocation2 + $0x8] sm:$0xff]
          %v546 = vld [vmem:[#allocation2 + $0x10] sm:$0xff]
          %v547 = vld [vmem:[#allocation2 + $0x18] sm:$0xff]
          %v548 = vld [vmem:[%s2] sm:$0x3]
          %v550 = vlaneseq
          %v551 = vshrl.u32 %v550, 7
          %v552 = vsub.s32 0, %v551
          %v553 = vrot.slane %v548, %v552
          %v554 = vlaneseq
          %v555 = vshrl.u32 %v554, 7
          %v556 = vsub.s32 1, %v555
          %v557 = vrot.slane %v548, %v556
          %v560 = vadd.f32 %v544, %v553
          %v561 = vadd.f32 %v545, %v557
          %v562 = vadd.f32 %v546, %v553
          %v563 = vadd.f32 %v547, %v557
          %v564 = vmul.f32 %v560, %v560
          %v565 = vmul.f32 %v561, %v561
          %v566 = vmul.f32 %v562, %v562
          %v567 = vmul.f32 %v563, %v563
          %v568 = vadd.f32 %v564, %v565
          %569 = vadd.xlane.f32.xlu0 %v568
          %v570 = vpop.xlane.xlu0 %569
          %v571 = vadd.f32 %v566, %v567
          %572 = vadd.xlane.f32.xlu0 %v571
          %v573 = vpop.xlane.xlu0 %572
          %v574 = vrcp.pop 256.0
          %v575 = vmul.f32 %v570, %v574
          %v576 = vmul.f32 %v573, %v574
          %v577 = vadd.f32 %v575, 1e-06
          %v578 = vadd.f32 %v576, 1e-06
          %v579 = vrsqrt.pop %v577
          %v580 = vrsqrt.pop %v578
          %v581 = vmul.f32 %v560, %v579
          %v582 = vmul.f32 %v561, %v579
          %v583 = vmul.f32 %v562, %v580
          %v584 = vmul.f32 %v563, %v580
          %v585 = vld [vmem:[%s3] sm:$0x3]
          %v587 = vlaneseq
          %v588 = vshrl.u32 %v587, 7
          %v589 = vsub.s32 0, %v588
          %v590 = vrot.slane %v585, %v589
          %v591 = vlaneseq
          %v592 = vshrl.u32 %v591, 7
          %v593 = vsub.s32 1, %v592
          %v594 = vrot.slane %v585, %v593
          %v597 = vmul.f32 %v581, %v590
          %v598 = vmul.f32 %v582, %v594
          %v599 = vmul.f32 %v583, %v590
          %v600 = vmul.f32 %v584, %v594
          %v601 = vpack.c.bf16 %v599, %v597
          %v602 = vpack.c.bf16 %v600, %v598
          %v605 = vunpack.c.l.b16 %v601
          %v606 = vunpack.c.l.b16 %v602
          %v607 = vunpack.c.h.b16 %v601
          %v608 = vunpack.c.h.b16 %v602
          %v609 = vpack.c.b16 %v606, %v605
          %v610 = vpack.c.b16 %v608, %v607
          %613 = vst [vmem:[%s269] sm:$0xff] %v609
          %614 = vst [vmem:[%s269 + $0x8] sm:$0xff] %v610
        $region52: #{tpu_custom_call.1} parent=35 // pred_fallthru
          _
        %s615 = sand.u32 %s149, 1
        %s616 = scalar_lea.sflag [#allocation5], %s615
        %s617 = sand.u32 %s149, 1
        %s618 = smul.addr %s617, 16
        %s619 = scalar_lea.vmem [#allocation8], %s618
        // Predicated region
        $region53: #{tpu_custom_call.1} parent=35 // pred_check
          %p620 = pneg %p159
        $region54: #{tpu_custom_call.1} parent=35 // pred_check_branch
          %622 = sbr.rel (%p620) target = $region56
        $region55: #{tpu_custom_call.1} parent=35 // pred_region
          %s623 = smul.u32 2, %s28
          %s625 = ssub.s32 256, 256
          %626 = vsyncadd %s616, %s625
          %s627 = smul.addr %s623, 2
          %s628 = smul.addr %s27, 4
          %s629 = sadd.s32 %s627, %s628
          %s630 = smul.addr %s629, 64
          %s631 = scalar_lea.hbm %s4, %s630
          %s632 = sshll.u32 %s619, 4
          %s633 = int_to_ptr.vmem [resolvable:$true] %s632
          %638 = dma.vmem_to_hbm [thread:$0]  %s633, 256, %s631, %s616, 128, 128, 8
        $region56: #{tpu_custom_call.1} parent=35 // pred_fallthru
          _
      $region36: #{tpu_custom_call.1} parent=5 // pred_fallthru
        _
      %p639 = scmp.le.s32.totalorder 2, %s17
      // Predicated region
      $region57: #{tpu_custom_call.1} parent=5 // pred_check
        %p640 = pneg %p639
      $region58: #{tpu_custom_call.1} parent=5 // pred_check_branch
        %642 = sbr.rel (%p640) target = $region60
      $region59: #{tpu_custom_call.1} parent=5 // pred_region
        %s643 = ssub.s32 %s17, 2
        // Predicated region
        $region61: #{tpu_custom_call.1} parent=59 // pred_check
          %p644 = pneg %p165
        $region62: #{tpu_custom_call.1} parent=59 // pred_check_branch
          %646 = sbr.rel (%p644) target = $region64
        $region63: #{tpu_custom_call.1} parent=59 // pred_region
          %s647 = sand.u32 %s150, 1
          %s648 = scalar_lea.sflag [#allocation5], %s647
          %s649 = sand.u32 %s150, 1
          %s650 = smul.addr %s649, 16
          %s651 = scalar_lea.vmem [#allocation8], %s650
          %652 = dma.done %s648, 256
        $region64: #{tpu_custom_call.1} parent=59 // pred_fallthru
          _
      $region60: #{tpu_custom_call.1} parent=5 // pred_fallthru
        _
    $region6: #{tpu_custom_call.1} parent=1 // loop_footer
      %s21 = sadd.s32 1, %s17
    $region7: #{tpu_custom_call.1} parent=1 // loop_footer_branch
      %16 = sbr.rel target = $region3
    $region8: #{tpu_custom_call.1} parent=1 // loop_exit
      _
    %653 = vsyncpa [#allocation4], 1
    %s654 = scalar_lea.sflag [#allocation4], 1
    %655 = vsyncpa %s654, 1
    %656 = vsyncpa [#allocation7], 1
    %657 = vsyncpa [#allocation5], 1
    %s658 = scalar_lea.sflag [#allocation5], 1
    %659 = vsyncpa %s658, 1

</llo_original>
